<compile_context>
chip_gen: v5e
topology: v5e:2x2
jax: 0.10.0
libtpu: 0.0.40
codegen_flags: <defaults>
</compile_context>

<pallas_src>
import functools

import jax
import jax.numpy as jnp
from jax.experimental import pallas as pl
from jax.experimental.pallas import tpu as pltpu

_LANES = 128
# ~2 MiB per input tile: >85% of the measured HBM roofline for streaming ops,
# and double-buffered in/out tiles (~8 MiB total) stay well inside the scoped
# VMEM budget on every TPU generation (v7x: 64 MiB physical VMEM).
_TARGET_TILE_BYTES = 2 * 1024 * 1024
_VMEM_LIMIT_BYTES = 32 * 1024 * 1024


def _sublane_multiple(dtype) -> int:
    # 8 for 32-bit, 16 for 16-bit, 32 for 8-bit element types.
    return max(8, 32 // jnp.dtype(dtype).itemsize)


def _pick_block_rows(n_rows: int, row_elems: int, elem_bytes: int, sub: int) -> int:
    rows = max(1, _TARGET_TILE_BYTES // max(1, row_elems * elem_bytes))
    rows = max(sub, (rows // sub) * sub)
    # No point tiling past the (sublane-rounded) number of rows in the array.
    rows_needed = ((n_rows + sub - 1) // sub) * sub
    return min(rows, rows_needed)


def _stable_softmax(x, approx: bool):
    m = jnp.max(x, axis=-1, keepdims=True)
    e = jnp.exp(x - m)
    s = jnp.sum(e, axis=-1, keepdims=True)
    if approx:
        # Optional EUP fast path; NOT the default because its relative error
        # can exceed 1e-3 (rows would not sum to 1 within tight tolerances).
        return e * pl.reciprocal(s, approx=True)
    return e / s


def _softmax_kernel(logits_ref, out_ref, *, approx: bool):
    x = logits_ref[...].astype(jnp.float32)
    out_ref[...] = _stable_softmax(x, approx).astype(out_ref.dtype)


def _packed_softmax_kernel(logits_ref, out_ref, *, n_actions: int, k: int, approx: bool):
    # Tile is (rows, k * n_actions): k independent batch rows packed along the
    # 128-wide lane axis.  Softmax is computed per n_actions-wide lane group
    # (static slices, fully unrolled at trace time, k <= 16), while the
    # HBM-facing load and store remain one full-width lane-dense tile.
    x = logits_ref[...].astype(jnp.float32)
    pieces = []
    for j in range(k):
        g = x[:, j * n_actions:(j + 1) * n_actions]
        pieces.append(_stable_softmax(g, approx))
    out_ref[...] = jnp.concatenate(pieces, axis=-1).astype(out_ref.dtype)


def discrete_policy_head_forward(logits: jax.Array, *, block_rows=None,
                                 approx_reciprocal: bool = False,
                                 pack_lanes: bool = True) -> jax.Array:
    """Pallas equivalent of DiscretePolicyHead.forward: softmax over dim=-1."""
    orig_shape = logits.shape
    assert logits.ndim >= 1, "expects (..., n_actions)"
    n_actions = orig_shape[-1]
    batch = 1
    for d in orig_shape[:-1]:
        batch *= d
    logits2d = logits.reshape(batch, n_actions)

    dtype = logits2d.dtype
    elem_bytes = jnp.dtype(dtype).itemsize
    sub = _sublane_multiple(dtype)

    # Lane-dense packing: fold k rows into one 128-wide lane row when possible.
    k = 1
    if pack_lanes and 0 < n_actions < _LANES and _LANES % n_actions == 0:
        k_cand = _LANES // n_actions
        if k_cand > 1 and batch >= k_cand and batch % k_cand == 0:
            k = k_cand

    if k > 1:
        x = logits2d.reshape(batch // k, k * n_actions)  # free contiguous reshape
        kernel = functools.partial(_packed_softmax_kernel, n_actions=n_actions,
                                   k=k, approx=approx_reciprocal)
    else:
        x = logits2d
        kernel = functools.partial(_softmax_kernel, approx=approx_reciprocal)

    n_rows, row_elems = x.shape

    if block_rows is None:
        block_rows = _pick_block_rows(n_rows, row_elems, elem_bytes, sub)
    else:
        block_rows = max(sub, (int(block_rows) // sub) * sub)

    # Ragged last block is handled by Pallas (masked writes) -- no host-side pad.
    grid = (pl.cdiv(n_rows, block_rows),)

    # TODO(synk): if block_rows * row_elems * elem_bytes ever exceeds the VMEM
    # budget (huge action vocabularies), add an action-tile grid axis marked
    # "arbitrary" with an online (flash-style) max/sum accumulator.

    out = pl.pallas_call(
        kernel,
        out_shape=jax.ShapeDtypeStruct((n_rows, row_elems), dtype),
        grid_spec=pltpu.PrefetchScalarGridSpec(
            num_scalar_prefetch=0,
            grid=grid,
            in_specs=[pl.BlockSpec((block_rows, row_elems), lambda i: (i, 0))],
            out_specs=pl.BlockSpec((block_rows, row_elems), lambda i: (i, 0)),
        ),
        compiler_params=pltpu.CompilerParams(
            # Batch axis is embarrassingly parallel -> shards across the two
            # TensorCores on v7x; harmless on single-core v5e/v6e.
            dimension_semantics=("parallel",),
            vmem_limit_bytes=_VMEM_LIMIT_BYTES,
        ),
    )(x)

    return out.reshape(orig_shape)


if __name__ == "__main__":
    key = jax.random.PRNGKey(0)
    k0, k1, k2, k3 = jax.random.split(key, 4)

    # Nominal module shape: Discrete(16) action space, batch of 2
    # (tiny batch -> unpacked path with a single ragged block, no padding).
    batch, n_actions = 2, 16
    logits = jax.random.normal(k0, (batch, n_actions), dtype=jnp.float32)
    probs = jax.block_until_ready(discrete_policy_head_forward(logits))
    ref = jax.nn.softmax(logits, axis=-1)
    assert probs.shape == (batch, n_actions)
    assert jnp.allclose(probs, ref, atol=1e-5), "mismatch vs reference softmax"
    assert jnp.allclose(jnp.sum(probs, axis=-1), 1.0, atol=1e-3)

    # Lane-packed path: batch divisible by 128 // n_actions -> (8, 128) layout.
    big = jax.random.normal(k1, (64, n_actions), dtype=jnp.float32)
    probs_big = jax.block_until_ready(discrete_policy_head_forward(big))
    assert jnp.allclose(probs_big, jax.nn.softmax(big, axis=-1), atol=1e-5)
    assert jnp.allclose(jnp.sum(probs_big, axis=-1), 1.0, atol=1e-3)

    # Ragged batch (not a multiple of the sublane tile): exercises the masked
    # last block with no host-side padding or output slicing.
    ragged = jax.random.normal(k2, (37, n_actions), dtype=jnp.float32)
    probs_r = jax.block_until_ready(discrete_policy_head_forward(ragged))
    assert jnp.allclose(probs_r, jax.nn.softmax(ragged, axis=-1), atol=1e-5)
    assert jnp.allclose(jnp.sum(probs_r, axis=-1), 1.0, atol=1e-3)

    # Wide action space (n_actions >= 128): unpacked, full-lane path.
    wide = jax.random.normal(k3, (8, 256), dtype=jnp.float32)
    probs_w = jax.block_until_ready(discrete_policy_head_forward(wide))
    assert jnp.allclose(probs_w, jax.nn.softmax(wide, axis=-1), atol=1e-5)
    assert jnp.allclose(jnp.sum(probs_w, axis=-1), 1.0, atol=1e-3)

    print("KERNEL_OK")
</pallas_src>

<mosaic_0001>
module attributes {stable_mosaic.version = 11 : i64} {
  func.func @_softmax_kernel(%arg0: i32, %arg1: memref<8x16xf32, #tpu.memory_space<vmem>>, %arg2: memref<8x16xf32, #tpu.memory_space<vmem>>) attributes {dimension_semantics = [#tpu.dimension_semantics<parallel>], iteration_bounds = array<i64: 1>, scalar_prefetch = 0 : i64, scratch_operands = 0 : i64, tpu.core_type = #tpu.core_type<tc>, window_params = [{transform_indices = @transform_0, window_bounds = array<i64: 8, 16>}, {transform_indices = @transform_1, window_bounds = array<i64: 8, 16>}]} {
    %c0 = arith.constant 0 : index
    %c0_0 = arith.constant 0 : index
    %0 = vector.load %arg1[%c0, %c0_0] : memref<8x16xf32, #tpu.memory_space<vmem>>, vector<8x16xf32>
    %cst = arith.constant dense<0xFF800000> : vector<8xf32>
    %1 = vector.multi_reduction <maximumf>, %0, %cst [1] : vector<8x16xf32> to vector<8xf32>
    %2 = vector.shape_cast %1 : vector<8xf32> to vector<8x1xf32>
    %3 = vector.broadcast %2 : vector<8x1xf32> to vector<8x16xf32>
    %4 = arith.subf %0, %3 : vector<8x16xf32>
    %5 = math.exp %4 : vector<8x16xf32>
    %cst_1 = arith.constant dense<0.000000e+00> : vector<8xf32>
    %6 = vector.multi_reduction <add>, %5, %cst_1 [1] : vector<8x16xf32> to vector<8xf32>
    %7 = vector.shape_cast %6 : vector<8xf32> to vector<8x1xf32>
    %8 = vector.broadcast %7 : vector<8x1xf32> to vector<8x16xf32>
    %9 = arith.divf %5, %8 : vector<8x16xf32>
    %c0_2 = arith.constant 0 : index
    %c0_3 = arith.constant 0 : index
    %10 = vector.load %arg2[%c0_2, %c0_3] : memref<8x16xf32, #tpu.memory_space<vmem>>, vector<8x16xf32>
    tpu.vector_store %arg2[%c0_2, %c0_3], %9 {strides = array<i32>} : memref<8x16xf32, #tpu.memory_space<vmem>>, vector<8x16xf32>,
    return
  }
  func.func @transform_0(%arg0: i32) -> (i32, i32) {
    %c0_i32 = arith.constant 0 : i32
    %c0_i32_0 = arith.constant 0 : i32
    return %arg0, %c0_i32 : i32, i32
  }
  func.func @transform_1(%arg0: i32) -> (i32, i32) {
    %c0_i32 = arith.constant 0 : i32
    %c0_i32_0 = arith.constant 0 : i32
    return %arg0, %c0_i32 : i32, i32
  }
}

</mosaic_0001>

<llo_original>
// kernel: tpu_custom_call.1
$region0: #{tpu_custom_call.1}
  #allocation0 [shape = 'u32[]', space=smem, size = 0x4, offset = 0x4, fixed_abs, tag = 'smem constant byte address 0x4 - core index']
  #allocation1 [shape = 'u32[72,128]{1,0:T(1,128)}', space=vmem, size = 0x9000, scoped, tag = 'internal scratch']
  %s0 = inlined_call_operand.hbm [shape: f32[2,16], index: 0, kind: input, shape index: {}]
  %s1 = inlined_call_operand.hbm [shape: f32[2,16], index: 1, kind: output, shape index: {}]
  %s2 = sld [smem:[#allocation0]]
  $region18: #{tpu_custom_call.1} parent=0
    _
  %s4 = ssub.s32 1, %s2
  %s5 = scalar_select 0, %s4, %s2
  $region1: #{tpu_custom_call.1} parent=0
    #allocation2 [shape = 'u8[4096]{0}', space=vmem, size = 0x1000, scoped, tag = 'input window, operand 0, single buffered']
    #allocation3 [shape = 's32[1]{0}', space=sflag, size = 0x4, scoped, tag = 'scoped memory for tpu_custom_call.1']
    #allocation4 [shape = 's32[1]{0}', space=sflag, size = 0x4, scoped, tag = 'scoped memory for tpu_custom_call.1']
    #allocation5 [shape = 'u8[4096]{0}', space=vmem, size = 0x1000, scoped, tag = 'output window, operand 0, single buffered']
    %6 = vsyncpa [#allocation3], 0
    %7 = vsyncpa [#allocation4], 0
    // Predicated region
    $region2: #{tpu_custom_call.1} parent=1 // pred_check
      _
    $region3: #{tpu_custom_call.1} parent=1 // pred_check_branch
      %9 = sbr.rel (0) target = $region5
    $region4: #{tpu_custom_call.1} parent=1 // pred_region
      %11 = vsyncadd [#allocation3], 96
      %s12 = sshll.u32 %s0, 4
      %s13 = int_to_ptr.hbm [resolvable:$true] %s12
      %s14 = sshll.u32 [#allocation2], 4
      %s15 = int_to_ptr.vmem [resolvable:$true] %s14
      %20 = dma.hbm_to_vmem [thread:$0]  %s13, 32, %s15, [#allocation3], 32, 32, 2
    $region5: #{tpu_custom_call.1} parent=1 // pred_fallthru
      _
    // Predicated region
    $region6: #{tpu_custom_call.1} parent=1 // pred_check
      _
    $region7: #{tpu_custom_call.1} parent=1 // pred_check_branch
      %22 = sbr.rel (0) target = $region9
    $region8: #{tpu_custom_call.1} parent=1 // pred_region
      %24 = dma.done [#allocation3], 128
    $region9: #{tpu_custom_call.1} parent=1 // pred_fallthru
      _
    %v25 = vld [vmem:[#allocation2] sm:$0xff]
    %vm26 = vcmask 130048
    %v27 = vsel %vm26, %v25, -inf
    %28 = vmax.xlane.f32.xlu0 %v27
    %v29 = vpop.xlane.xlu0 %28
    %v30 = vsub.f32 %v25, %v29
    %v31 = vmul.f32 %v30, 1.442695
    %v32 = vpow.pop %v31
    %v33 = vsel %vm26, %v32, 0.0
    %34 = vadd.xlane.f32.xlu0 %v33
    %v35 = vpop.xlane.xlu0 %34
    %v36 = vrcp.pop %v35
    %v37 = vmul.f32 %v35, %v36
    %v38 = vsub.f32 1.0, %v37
    %v39 = vmul.f32 %v36, %v38
    %v40 = vadd.f32 %v36, %v39
    %vm41 = vweird.f32 %v35
    %vm42 = vweird.f32 %v36
    %vm43 = vmor %vm41, %vm42
    %v44 = vsel %vm43, %v36, %v40
    %v45 = vand.u32 2147483647, %v35
    %vm46 = vcmp.eq.f32.partialorder %v45, 8.507059e+37
    %v47 = vand.u32 %v35, 2147483648
    %v48 = vor.u32 1.1754944e-38, %v47
    %v49 = vsel %vm46, %v48, %v44
    %v50 = vmul.f32 %v32, %v49
    %51 = vst.msk [vmem:[#allocation5] sm:$0xff] %vm26, %v50
    // Predicated region
    $region10: #{tpu_custom_call.1} parent=1 // pred_check
      _
    $region11: #{tpu_custom_call.1} parent=1 // pred_check_branch
      %53 = sbr.rel (0) target = $region13
    $region12: #{tpu_custom_call.1} parent=1 // pred_region
      %55 = vsyncadd [#allocation4], 96
      %s56 = sshll.u32 [#allocation5], 4
      %s57 = int_to_ptr.vmem [resolvable:$true] %s56
      %s58 = sshll.u32 %s1, 4
      %s59 = int_to_ptr.hbm [resolvable:$true] %s58
      %64 = dma.vmem_to_hbm [thread:$0]  %s57, 32, %s59, [#allocation4], 32, 32, 2
    $region13: #{tpu_custom_call.1} parent=1 // pred_fallthru
      _
    // Predicated region
    $region14: #{tpu_custom_call.1} parent=1 // pred_check
      _
    $region15: #{tpu_custom_call.1} parent=1 // pred_check_branch
      %66 = sbr.rel (0) target = $region17
    $region16: #{tpu_custom_call.1} parent=1 // pred_region
      %68 = dma.done [#allocation4], 128
    $region17: #{tpu_custom_call.1} parent=1 // pred_fallthru
      _
    %69 = vsyncpa [#allocation3], 1
    %70 = vsyncpa [#allocation4], 1

</llo_original>
